<compile_context>
chip_gen: v7x
topology: tpu7x:2x2x1
jax: 0.10.0
libtpu: 0.0.40
codegen_flags: <defaults>
</compile_context>

<pallas_src>
import functools

import jax
import jax.numpy as jnp
from jax.experimental import pallas as pl
from jax.experimental.pallas import tpu as pltpu

_CHUNK_F32_TARGET = 128 * 1024      # ~32 vregs per chunk-sized f32 plane
_HEADROOM_BYTES = 2 * 1024 * 1024   # slack for output buffers / compiler scratch


def _entropy_kernel(x_ref, out_ref, *, num, chunk):
    blk = x_ref.shape[0]
    n_chunks = blk // chunk                 # wrapper guarantees blk % chunk == 0
    block_base = pl.program_id(0) * blk

    def chunk_sum(start):
        # Chunk-sized f32 working set only: x, e, ez never exist at block size.
        x = x_ref[pl.ds(start, chunk), :, :].astype(jnp.float32)  # (chunk, ms1, ms2)

        # Per-slice max: sublane reduce (axis=1, VALU-heavy) first, lane
        # reduce (axis=2, XLU) only on the collapsed (chunk, 1, ms2) plane.
        g = jnp.max(jnp.max(x, axis=1, keepdims=True), axis=2, keepdims=True)
        z = x - g
        e = jnp.exp(z)                      # single exp per element, both axes
        ez = e * z

        # softmax over axis 1 (ms1): per-(slice, column) entropy terms.
        s1 = jnp.sum(e, axis=1, keepdims=True)      # (chunk, 1, ms2)
        t1 = jnp.sum(ez, axis=1, keepdims=True)
        # softmax over axis 2 (ms2): per-(slice, row) entropy terms.
        s2 = jnp.sum(e, axis=2, keepdims=True)      # (chunk, ms1, 1)
        t2 = jnp.sum(ez, axis=2, keepdims=True)

        # Keep results finite if a row/column max sits >~87 below the slice
        # max (f32 underflow of the per-axis sum); no effect for typical
        # logit ranges.  (Exact division kept: approx reciprocal is a
        # noise-level win here and would eat into the tolerance.)
        s1 = jnp.maximum(s1, jnp.float32(1e-30))
        s2 = jnp.maximum(s2, jnp.float32(1e-30))

        ent1 = t1 / s1 - jnp.log(s1)        # sum_i p_i log p_i  (per column)
        ent2 = t2 / s2 - jnp.log(s2)        # sum_j p_j log p_j  (per row)

        per_b = jnp.sum(ent1, axis=2) + jnp.sum(ent2, axis=1)     # (chunk, 1)

        # Mask slices past `num` (padded tail of the last block).
        idx = (block_base + start
               + jax.lax.broadcasted_iota(jnp.int32, (chunk, 1), 0))
        return jnp.where(idx < num, per_b, 0.0)

    acc0 = jnp.zeros((chunk, 1), jnp.float32)
    if n_chunks == 1:
        acc = acc0 + chunk_sum(0)
    else:
        acc = jax.lax.fori_loop(
            0, n_chunks,
            lambda c, a: a + chunk_sum(pl.multiple_of(c * chunk, chunk)),
            acc0)

    total = jnp.sum(acc)                    # scalar partial for this block
    # Full (8,128) tile per step -> unmasked, lane-dense writeback.
    out_ref[...] = jnp.full(out_ref.shape, total, dtype=jnp.float32)


def entropy_pallas(x, *, target_block_bytes=4 * 1024 * 1024,
                   chunk_target_bytes=_CHUNK_F32_TARGET):
    num, ms1, ms2 = x.shape
    itemsize = x.dtype.itemsize
    slice_in_bytes = ms1 * ms2 * itemsize   # per-slice HBM/DMA footprint
    slice_f32_bytes = ms1 * ms2 * 4         # per-slice f32 working footprint

    # Generation-aware VMEM budget: <= 3/4 of per-core capacity, capped at
    # 96 MiB (v5e/v6e: 128 MiB -> 96 MiB; v7x: 64 MiB -> 48 MiB).
    try:
        vmem_cap = int(pltpu.get_tpu_info().vmem_capacity_bytes)
    except Exception:
        vmem_cap = 64 * 1024 * 1024         # conservative (v7x-safe) fallback
    vmem_limit = min((vmem_cap * 3) // 4, 96 * 1024 * 1024)

    # In-kernel sub-chunk over slices: keeps x_f32 / e / e*z ~vreg-sized.
    chunk = max(1, chunk_target_bytes // slice_f32_bytes)

    # Block over `num`: per-step DMA ~ target_block_bytes of *input* dtype,
    # double-buffered input + chunk working set must fit the VMEM budget,
    # and nb >= 2 whenever possible (v7x: two TCs via "parallel").
    working_bytes = 6 * chunk * slice_f32_bytes          # x_f32, e, ez + slack
    input_budget = vmem_limit - working_bytes - _HEADROOM_BYTES
    blk_vmem_cap = max(1, input_budget // (2 * slice_in_bytes))
    blk = max(1, min(target_block_bytes // slice_in_bytes, blk_vmem_cap, num))
    if num >= 2:
        blk = min(blk, pl.cdiv(num, 2))
    chunk = min(chunk, blk)
    blk = max(chunk, (blk // chunk) * chunk)             # blk % chunk == 0
    nb = pl.cdiv(num, blk)
    # TODO(synk): if a single (ms1, ms2) slice alone outgrows the VMEM budget,
    # add an inner pipelined loop over ms1 chunks (two-pass max-then-accumulate).

    partials = pl.pallas_call(
        functools.partial(_entropy_kernel, num=num, chunk=chunk),
        out_shape=jax.ShapeDtypeStruct((nb, 8, 128), jnp.float32),
        grid=(nb,),
        in_specs=[pl.BlockSpec((blk, ms1, ms2), lambda b: (b, 0, 0))],
        out_specs=pl.BlockSpec((1, 8, 128), lambda b: (b, 0, 0)),
        compiler_params=pltpu.CompilerParams(
            dimension_semantics=("parallel",),   # no cross-step carry
            vmem_limit_bytes=int(vmem_limit),
        ),
    )(x)

    # Final tiny reduction + negate + normalization (cheap scalar glue).
    total = jnp.sum(partials[:, 0, 0])
    return (-total) / (ms1 * ms2)


def entropy_ref(x):
    x = x.astype(jnp.float32)
    num, ms1, ms2 = x.shape
    p2g = jax.nn.softmax(x, axis=1) * jax.nn.log_softmax(x, axis=1)
    g2p = jax.nn.softmax(x, axis=2) * jax.nn.log_softmax(x, axis=2)
    return (-p2g.reshape(num, -1).sum() - g2p.reshape(num, -1).sum()) / (ms1 * ms2)


if __name__ == "__main__":
    key = jax.random.PRNGKey(0)
    # (num, ms1, ms2) — small, lane/sublane aligned
    x = jax.random.normal(key, (10, 16, 128), dtype=jnp.float32)

    ref = entropy_ref(x)

    # Default sizing: blk capped at cdiv(num, 2) -> 2 grid steps, 1 chunk each.
    out = jax.block_until_ready(entropy_pallas(x))
    assert jnp.allclose(out, ref, rtol=1e-4, atol=1e-4), (out, ref)

    # Multi-block + masked-tail path (blk=3 -> 4 blocks, last has 2 padded slices).
    out_small = jax.block_until_ready(
        entropy_pallas(x, target_block_bytes=3 * 16 * 128 * 4))
    assert jnp.allclose(out_small, ref, rtol=1e-4, atol=1e-4), (out_small, ref)

    # Multi-chunk in-kernel loop + masked tail (chunk=1, blk=4 -> 3 blocks,
    # last block: 2 valid slices + 2 padded).
    out_chunked = jax.block_until_ready(
        entropy_pallas(x, target_block_bytes=4 * 16 * 128 * 4,
                       chunk_target_bytes=16 * 128 * 4))
    assert jnp.allclose(out_chunked, ref, rtol=1e-4, atol=1e-4), (out_chunked, ref)

    # bf16 input exercises the dtype-aware block sizing (kernel math stays f32).
    xb = jax.random.normal(key, (10, 16, 128), dtype=jnp.bfloat16)
    out_bf16 = jax.block_until_ready(entropy_pallas(xb))
    assert jnp.allclose(out_bf16, entropy_ref(xb), rtol=1e-3, atol=1e-3), (
        out_bf16, entropy_ref(xb))

    print("KERNEL_OK")
</pallas_src>

<mosaic_0001>
module attributes {stable_mosaic.version = 11 : i64} {
  func.func @_entropy_kernel(%arg0: i32, %arg1: memref<5x16x128xf32, #tpu.memory_space<vmem>>, %arg2: memref<1x8x128xf32, #tpu.memory_space<vmem>>) attributes {dimension_semantics = [#tpu.dimension_semantics<parallel>], iteration_bounds = array<i64: 2>, scalar_prefetch = 0 : i64, scratch_operands = 0 : i64, tpu.core_type = #tpu.core_type<tc>, window_params = [{transform_indices = @transform_0, window_bounds = array<i64: 5, 16, 128>}, {transform_indices = @transform_1, window_bounds = array<i64: 1, 8, 128>}]} {
    %c5_i32 = arith.constant 5 : i32
    %0 = arith.muli %arg0, %c5_i32 : i32
    %cst = arith.constant 0.000000e+00 : f32
    %1 = vector.broadcast %cst : f32 to vector<5x1xf32>
    %c0 = arith.constant 0 : index
    %c0_0 = arith.constant 0 : index
    %c0_1 = arith.constant 0 : index
    %2 = vector.load %arg1[%c0, %c0_0, %c0_1] : memref<5x16x128xf32, #tpu.memory_space<vmem>>, vector<5x16x128xf32>
    %cst_2 = arith.constant dense<0xFF800000> : vector<5x128xf32>
    %3 = vector.multi_reduction <maximumf>, %2, %cst_2 [1] : vector<5x16x128xf32> to vector<5x128xf32>
    %4 = vector.shape_cast %3 : vector<5x128xf32> to vector<5x1x128xf32>
    %cst_3 = arith.constant dense<0xFF800000> : vector<5x1xf32>
    %5 = vector.multi_reduction <maximumf>, %4, %cst_3 [2] : vector<5x1x128xf32> to vector<5x1xf32>
    %6 = vector.shape_cast %5 : vector<5x1xf32> to vector<5x1x1xf32>
    %7 = vector.broadcast %6 : vector<5x1x1xf32> to vector<5x16x128xf32>
    %8 = arith.subf %2, %7 : vector<5x16x128xf32>
    %9 = math.exp %8 : vector<5x16x128xf32>
    %10 = arith.mulf %9, %8 : vector<5x16x128xf32>
    %cst_4 = arith.constant dense<0.000000e+00> : vector<5x128xf32>
    %11 = vector.multi_reduction <add>, %9, %cst_4 [1] : vector<5x16x128xf32> to vector<5x128xf32>
    %12 = vector.shape_cast %11 : vector<5x128xf32> to vector<5x1x128xf32>
    %cst_5 = arith.constant dense<0.000000e+00> : vector<5x128xf32>
    %13 = vector.multi_reduction <add>, %10, %cst_5 [1] : vector<5x16x128xf32> to vector<5x128xf32>
    %14 = vector.shape_cast %13 : vector<5x128xf32> to vector<5x1x128xf32>
    %cst_6 = arith.constant dense<0.000000e+00> : vector<5x16xf32>
    %15 = vector.multi_reduction <add>, %9, %cst_6 [2] : vector<5x16x128xf32> to vector<5x16xf32>
    %16 = vector.shape_cast %15 : vector<5x16xf32> to vector<5x16x1xf32>
    %cst_7 = arith.constant dense<0.000000e+00> : vector<5x16xf32>
    %17 = vector.multi_reduction <add>, %10, %cst_7 [2] : vector<5x16x128xf32> to vector<5x16xf32>
    %18 = vector.shape_cast %17 : vector<5x16xf32> to vector<5x16x1xf32>
    %cst_8 = arith.constant 1.000000e-30 : f32
    %19 = vector.broadcast %cst_8 : f32 to vector<5x1x128xf32>
    %20 = arith.maximumf %12, %19 : vector<5x1x128xf32>
    %cst_9 = arith.constant 1.000000e-30 : f32
    %21 = vector.broadcast %cst_9 : f32 to vector<5x16x1xf32>
    %22 = arith.maximumf %16, %21 : vector<5x16x1xf32>
    %23 = arith.divf %14, %20 : vector<5x1x128xf32>
    %24 = math.log %20 : vector<5x1x128xf32>
    %25 = arith.subf %23, %24 : vector<5x1x128xf32>
    %26 = arith.divf %18, %22 : vector<5x16x1xf32>
    %27 = math.log %22 : vector<5x16x1xf32>
    %28 = arith.subf %26, %27 : vector<5x16x1xf32>
    %cst_10 = arith.constant dense<0.000000e+00> : vector<5x1xf32>
    %29 = vector.multi_reduction <add>, %25, %cst_10 [2] : vector<5x1x128xf32> to vector<5x1xf32>
    %cst_11 = arith.constant dense<0.000000e+00> : vector<5x1xf32>
    %30 = vector.multi_reduction <add>, %28, %cst_11 [1] : vector<5x16x1xf32> to vector<5x1xf32>
    %31 = arith.addf %29, %30 : vector<5x1xf32>
    %c0_i32 = arith.constant 0 : i32
    %32 = arith.addi %0, %c0_i32 : i32
    %33 = tpu.iota {dimensions = array<i32: 0>} : vector<5x1xi32>
    %34 = vector.broadcast %32 : i32 to vector<5x1xi32>
    %35 = arith.addi %34, %33 : vector<5x1xi32>
    %c10_i32 = arith.constant 10 : i32
    %36 = vector.broadcast %c10_i32 : i32 to vector<5x1xi32>
    %37 = arith.cmpi slt, %35, %36 : vector<5x1xi32>
    %cst_12 = arith.constant 0.000000e+00 : f32
    %38 = vector.broadcast %cst_12 : f32 to vector<5x1xf32>
    %39 = arith.select %37, %31, %38 : vector<5x1xi1>, vector<5x1xf32>
    %40 = arith.addf %1, %39 : vector<5x1xf32>
    %41 = vector.shape_cast %40 : vector<5x1xf32> to vector<1x5x1xf32>
    %cst_13 = arith.constant dense<0.000000e+00> : vector<1xf32>
    %42 = vector.multi_reduction <add>, %41, %cst_13 [1, 2] : vector<1x5x1xf32> to vector<1xf32>
    %43 = vector.shape_cast %42 : vector<1xf32> to vector<1x1x1xf32>
    %44 = vector.extract %43[0, 0, 0] : f32 from vector<1x1x1xf32>
    %45 = vector.broadcast %44 : f32 to vector<1x8x128xf32>
    %c0_14 = arith.constant 0 : index
    %c0_15 = arith.constant 0 : index
    %c0_16 = arith.constant 0 : index
    %46 = vector.load %arg2[%c0_14, %c0_15, %c0_16] : memref<1x8x128xf32, #tpu.memory_space<vmem>>, vector<1x8x128xf32>
    tpu.vector_store %arg2[%c0_14, %c0_15, %c0_16], %45 {strides = array<i32>} : memref<1x8x128xf32, #tpu.memory_space<vmem>>, vector<1x8x128xf32>,
    return
  }
  func.func @transform_0(%arg0: i32) -> (i32, i32, i32) {
    %c0_i32 = arith.constant 0 : i32
    %c0_i32_0 = arith.constant 0 : i32
    %c0_i32_1 = arith.constant 0 : i32
    return %arg0, %c0_i32, %c0_i32_0 : i32, i32, i32
  }
  func.func @transform_1(%arg0: i32) -> (i32, i32, i32) {
    %c0_i32 = arith.constant 0 : i32
    %c0_i32_0 = arith.constant 0 : i32
    %c0_i32_1 = arith.constant 0 : i32
    return %arg0, %c0_i32, %c0_i32_0 : i32, i32, i32
  }
}

</mosaic_0001>

<llo_original>
// kernel: tpu_custom_call.1
$region0: #{tpu_custom_call.1}
  #allocation0 [shape = 'u32[]', space=smem, size = 0x4, offset = 0x4, fixed_abs, tag = 'smem constant byte address 0x4 - core index']
  #allocation1 [shape = 'u32[144,128]{1,0:T(1,128)}', space=vmem, size = 0x12000, scoped, tag = 'internal scratch']
  %s0 = inlined_call_operand.hbm [shape: f32[10,16,128], index: 0, kind: input, shape index: {}]
  %s1 = inlined_call_operand.hbm [shape: f32[2,8,128], index: 1, kind: output, shape index: {}]
  %s2 = sld [smem:[#allocation0]]
  $region41: #{tpu_custom_call.1} parent=0
    _
  %s4 = ssub.s32 1, %s2
  %s5 = scalar_select 0, %s4, %s2
  $region1: #{tpu_custom_call.1} parent=0
    #allocation2 [shape = 'u8[81920]{0}', space=vmem, size = 0x14000, scoped, tag = 'input window, operand 0']
    #allocation3 [shape = 's32[2]{0}', space=sflag, size = 0x8, scoped, tag = 'scoped memory for tpu_custom_call.1']
    #allocation4 [shape = 's32[2]{0}', space=sflag, size = 0x8, scoped, tag = 'scoped memory for tpu_custom_call.1']
    #allocation5 [shape = 'u8[8192]{0}', space=vmem, size = 0x2000, scoped, tag = 'output window, operand 0']
    %6 = vsyncpa [#allocation3], 0
    %s7 = scalar_lea.sflag [#allocation3], 1
    %8 = vsyncpa %s7, 0
    %9 = vsyncpa [#allocation4], 0
    %s10 = scalar_lea.sflag [#allocation4], 1
    %11 = vsyncpa %s10, 0
    loop: start=0, step=1, limit=4
    $region2: #{tpu_custom_call.1} parent=1 // loop_pre_header
      _
    $region3: #{tpu_custom_call.1} parent=1 // loop_header
      %s13 = sphi 0, %s17
      %p14 = scmp.ge.s32.totalorder %s13, 4
      %s23 = sphi 0, %s25
      %s26 = sphi 0, %s23
      %s27 = sphi 0, %s26
      %s43 = sphi 0, %s27
      %s49 = sphi 0, %s51
      %s52 = sphi 0, %s49
      %s53 = sphi 0, %s52
      %s69 = sphi 0, %s53
    $region4: #{tpu_custom_call.1} parent=1 // loop_header_branch
      %16 = sbr.rel (%p14) target = $region8
    $region5: #{tpu_custom_call.1} parent=1 // loop_body
      %s18 = ssub.s32 %s13, 1
      %s19 = ssub.s32 %s13, 2
      %s20 = sadd.s32 %s13, 1
      %s21 = ssub.s32 %s13, %s20
      %p22 = scmp.eq.s32.totalorder %s21, 0
      %s24 = sadd.s32 %s23, 1
      %s25 = scalar_select %p22, %s23, %s24
      %p28 = pneg %p22
      %p29 = scmp.eq.s32.totalorder %s13, 1
      %p30 = por %p28, %p29
      %p31 = scmp.ne.s32.totalorder %s23, %s26
      %p32 = scmp.eq.s32.totalorder %s13, 0
      %p33 = por %p31, %p32
      %p34 = scmp.ne.s32.totalorder %s23, %s26
      %p35 = scmp.eq.s32.totalorder %s18, 1
      %p36 = por %p34, %p35
      %p37 = scmp.ne.s32.totalorder %s26, %s27
      %p38 = scmp.eq.s32.totalorder %s18, 0
      %p39 = por %p37, %p38
      %p40 = scmp.ne.s32.totalorder %s26, %s27
      %p41 = scmp.eq.s32.totalorder %s19, 1
      %p42 = por %p40, %p41
      %p44 = scmp.ne.s32.totalorder %s27, %s43
      %p45 = scmp.eq.s32.totalorder %s19, 0
      %p46 = por %p44, %p45
      %s47 = ssub.s32 %s13, %s20
      %p48 = scmp.eq.s32.totalorder %s47, 0
      %s50 = sadd.s32 %s49, 1
      %s51 = scalar_select %p48, %s49, %s50
      %p54 = pneg %p48
      %p55 = scmp.eq.s32.totalorder %s13, 1
      %p56 = por %p54, %p55
      %p57 = scmp.ne.s32.totalorder %s49, %s52
      %p58 = scmp.eq.s32.totalorder %s13, 0
      %p59 = por %p57, %p58
      %p60 = scmp.ne.s32.totalorder %s49, %s52
      %p61 = scmp.eq.s32.totalorder %s18, 1
      %p62 = por %p60, %p61
      %p63 = scmp.ne.s32.totalorder %s52, %s53
      %p64 = scmp.eq.s32.totalorder %s18, 0
      %p65 = por %p63, %p64
      %p66 = scmp.ne.s32.totalorder %s52, %s53
      %p67 = scmp.eq.s32.totalorder %s19, 1
      %p68 = por %p66, %p67
      %p70 = scmp.ne.s32.totalorder %s53, %s69
      %p71 = scmp.eq.s32.totalorder %s19, 0
      %p72 = por %p70, %p71
      %p73 = scmp.le.s32.totalorder 1, %s13
      %p74 = scmp.lt.s32.totalorder %s13, 3
      %p75 = pnand %p73, %p74
      %p76 = pneg %p75
      // Predicated region
      $region9: #{tpu_custom_call.1} parent=5 // pred_check
        _
      $region10: #{tpu_custom_call.1} parent=5 // pred_check_branch
        %78 = sbr.rel (%p75) target = $region12
      $region11: #{tpu_custom_call.1} parent=5 // pred_region
        %s79 = ssub.s32 %s13, 1
      $region12: #{tpu_custom_call.1} parent=5 // pred_fallthru
        _
      %p80 = scmp.lt.s32.totalorder %s13, 2
      // Predicated region
      $region13: #{tpu_custom_call.1} parent=5 // pred_check
        %p81 = pneg %p80
      $region14: #{tpu_custom_call.1} parent=5 // pred_check_branch
        %83 = sbr.rel (%p81) target = $region16
      $region15: #{tpu_custom_call.1} parent=5 // pred_region
        // Predicated region
        $region17: #{tpu_custom_call.1} parent=15 // pred_check
          %p84 = pneg %p33
        $region18: #{tpu_custom_call.1} parent=15 // pred_check_branch
          %86 = sbr.rel (%p84) target = $region20
        $region19: #{tpu_custom_call.1} parent=15 // pred_region
          %s87 = sand.u32 %s23, 1
          %s88 = scalar_lea.sflag [#allocation3], %s87
          %s89 = sand.u32 %s23, 1
          %s90 = smul.addr %s89, 80
          %s91 = scalar_lea.vmem [#allocation2], %s90
          %s92 = smul.u32 5, %s13
          %s94 = ssub.s32 1280, 1280
          %95 = vsyncadd %s88, %s94
          %s96 = smul.addr %s92, 2
          %s97 = smul.addr %s96, 128
          %s98 = scalar_lea.hbm %s0, %s97
          %s99 = sshll.u32 %s91, 4
          %s100 = int_to_ptr.vmem [resolvable:$true] %s99
          %105 = dma.hbm_to_vmem [thread:$0]  %s98, 1280, %s100, %s88, 128, 128, 8
        $region20: #{tpu_custom_call.1} parent=15 // pred_fallthru
          _
      $region16: #{tpu_custom_call.1} parent=5 // pred_fallthru
        _
      %p106 = scmp.le.s32.totalorder 1, %s13
      %p107 = scmp.lt.s32.totalorder %s13, 3
      %p108 = pnand %p106, %p107
      %p109 = pneg %p108
      // Predicated region
      $region21: #{tpu_custom_call.1} parent=5 // pred_check
        _
      $region22: #{tpu_custom_call.1} parent=5 // pred_check_branch
        %111 = sbr.rel (%p108) target = $region24
      $region23: #{tpu_custom_call.1} parent=5 // pred_region
        %s112 = ssub.s32 %s13, 1
        %s113 = sand.u32 %s26, 1
        %s114 = scalar_lea.sflag [#allocation3], %s113
        %s115 = sand.u32 %s26, 1
        %s116 = smul.addr %s115, 80
        %s117 = scalar_lea.vmem [#allocation2], %s116
        // Predicated region
        $region25: #{tpu_custom_call.1} parent=23 // pred_check
          %p118 = pneg %p39
        $region26: #{tpu_custom_call.1} parent=23 // pred_check_branch
          %120 = sbr.rel (%p118) target = $region28
        $region27: #{tpu_custom_call.1} parent=23 // pred_region
          %121 = dma.done %s114, 1280
        $region28: #{tpu_custom_call.1} parent=23 // pred_fallthru
          _
        %s122 = sand.u32 %s26, 1
        %s123 = scalar_lea.sflag [#allocation3], %s122
        %s124 = sand.u32 %s26, 1
        %s125 = smul.addr %s124, 80
        %s126 = scalar_lea.vmem [#allocation2], %s125
        %p127 = pneg %p39
        %p128 = pneg %p36
        %p129 = pneg %p65
        %p130 = pneg %p62
        %s131 = sand.u32 %s52, 1
        %s132 = scalar_lea.sflag [#allocation4], %s131
        %s133 = sand.u32 %s52, 1
        %s134 = smul.addr %s133, 8
        %s135 = scalar_lea.vmem [#allocation5], %s134
        %s136 = smul.u32 5, %s18
        %s137 = smul.u32 %s18, 5
        %v138 = vld [vmem:[%s117] sm:$0xff]
        %v139 = vld [vmem:[%s117 + $0x8] sm:$0xff]
        %v140 = vld [vmem:[%s117 + $0x10] sm:$0xff]
        %v141 = vld [vmem:[%s117 + $0x18] sm:$0xff]
        %v142 = vld [vmem:[%s117 + $0x20] sm:$0xff]
        %v143 = vld [vmem:[%s117 + $0x28] sm:$0xff]
        %v144 = vld [vmem:[%s117 + $0x30] sm:$0xff]
        %v145 = vld [vmem:[%s117 + $0x38] sm:$0xff]
        %v146 = vld [vmem:[%s117 + $0x40] sm:$0xff]
        %v147 = vld [vmem:[%s117 + $0x48] sm:$0xff]
        %v148 = vmax.f32 %v138, %v139
        %v149 = vrot.slane %v148, 4
        %v150 = vmax.f32 %v148, %v149
        %v151 = vrot.slane %v150, 2
        %v152 = vmax.f32 %v150, %v151
        %v153 = vrot.slane %v152, 1
        %v154 = vmax.f32 %v152, %v153
        %v155 = vmax.f32 %v140, %v141
        %v156 = vrot.slane %v155, 4
        %v157 = vmax.f32 %v155, %v156
        %v158 = vrot.slane %v157, 2
        %v159 = vmax.f32 %v157, %v158
        %v160 = vrot.slane %v159, 1
        %v161 = vmax.f32 %v159, %v160
        %v162 = vmax.f32 %v142, %v143
        %v163 = vrot.slane %v162, 4
        %v164 = vmax.f32 %v162, %v163
        %v165 = vrot.slane %v164, 2
        %v166 = vmax.f32 %v164, %v165
        %v167 = vrot.slane %v166, 1
        %v168 = vmax.f32 %v166, %v167
        %v169 = vmax.f32 %v144, %v145
        %v170 = vrot.slane %v169, 4
        %v171 = vmax.f32 %v169, %v170
        %v172 = vrot.slane %v171, 2
        %v173 = vmax.f32 %v171, %v172
        %v174 = vrot.slane %v173, 1
        %v175 = vmax.f32 %v173, %v174
        %v176 = vmax.f32 %v146, %v147
        %v177 = vrot.slane %v176, 4
        %v178 = vmax.f32 %v176, %v177
        %v179 = vrot.slane %v178, 2
        %v180 = vmax.f32 %v178, %v179
        %v181 = vrot.slane %v180, 1
        %v182 = vmax.f32 %v180, %v181
        %183 = vmax.xlane.f32.xlu0 %v154
        %v184 = vpop.xlane.xlu0 %183
        %185 = vmax.xlane.f32.xlu0 %v161
        %v186 = vpop.xlane.xlu0 %185
        %187 = vmax.xlane.f32.xlu0 %v168
        %v188 = vpop.xlane.xlu0 %187
        %189 = vmax.xlane.f32.xlu0 %v175
        %v190 = vpop.xlane.xlu0 %189
        %191 = vmax.xlane.f32.xlu0 %v182
        %v192 = vpop.xlane.xlu0 %191
        %v193 = vsub.f32 %v138, %v184
        %v194 = vsub.f32 %v139, %v184
        %v195 = vsub.f32 %v140, %v186
        %v196 = vsub.f32 %v141, %v186
        %v197 = vsub.f32 %v142, %v188
        %v198 = vsub.f32 %v143, %v188
        %v199 = vsub.f32 %v144, %v190
        %v200 = vsub.f32 %v145, %v190
        %v201 = vsub.f32 %v146, %v192
        %v202 = vsub.f32 %v147, %v192
        %v203 = vmul.f32 %v193, 1.442695
        %v204 = vpow.pop %v203
        %v205 = vmul.f32 %v194, 1.442695
        %v206 = vpow.pop %v205
        %v207 = vmul.f32 %v195, 1.442695
        %v208 = vpow.pop %v207
        %v209 = vmul.f32 %v196, 1.442695
        %v210 = vpow.pop %v209
        %v211 = vmul.f32 %v197, 1.442695
        %v212 = vpow.pop %v211
        %v213 = vmul.f32 %v198, 1.442695
        %v214 = vpow.pop %v213
        %v215 = vmul.f32 %v199, 1.442695
        %v216 = vpow.pop %v215
        %v217 = vmul.f32 %v200, 1.442695
        %v218 = vpow.pop %v217
        %v219 = vmul.f32 %v201, 1.442695
        %v220 = vpow.pop %v219
        %v221 = vmul.f32 %v202, 1.442695
        %v222 = vpow.pop %v221
        %v223 = vmul.f32 %v204, %v193
        %v224 = vmul.f32 %v206, %v194
        %v225 = vmul.f32 %v208, %v195
        %v226 = vmul.f32 %v210, %v196
        %v227 = vmul.f32 %v212, %v197
        %v228 = vmul.f32 %v214, %v198
        %v229 = vmul.f32 %v216, %v199
        %v230 = vmul.f32 %v218, %v200
        %v231 = vmul.f32 %v220, %v201
        %v232 = vmul.f32 %v222, %v202
        %v233 = vadd.f32 %v204, %v206
        %v234 = vrot.slane %v233, 4
        %v235 = vadd.f32 %v233, %v234
        %v236 = vrot.slane %v235, 2
        %v237 = vadd.f32 %v235, %v236
        %v238 = vrot.slane %v237, 1
        %v239 = vadd.f32 %v237, %v238
        %v240 = vadd.f32 %v208, %v210
        %v241 = vrot.slane %v240, 4
        %v242 = vadd.f32 %v240, %v241
        %v243 = vrot.slane %v242, 2
        %v244 = vadd.f32 %v242, %v243
        %v245 = vrot.slane %v244, 1
        %v246 = vadd.f32 %v244, %v245
        %v247 = vadd.f32 %v212, %v214
        %v248 = vrot.slane %v247, 4
        %v249 = vadd.f32 %v247, %v248
        %v250 = vrot.slane %v249, 2
        %v251 = vadd.f32 %v249, %v250
        %v252 = vrot.slane %v251, 1
        %v253 = vadd.f32 %v251, %v252
        %v254 = vadd.f32 %v216, %v218
        %v255 = vrot.slane %v254, 4
        %v256 = vadd.f32 %v254, %v255
        %v257 = vrot.slane %v256, 2
        %v258 = vadd.f32 %v256, %v257
        %v259 = vrot.slane %v258, 1
        %v260 = vadd.f32 %v258, %v259
        %v261 = vadd.f32 %v220, %v222
        %v262 = vrot.slane %v261, 4
        %v263 = vadd.f32 %v261, %v262
        %v264 = vrot.slane %v263, 2
        %v265 = vadd.f32 %v263, %v264
        %v266 = vrot.slane %v265, 1
        %v267 = vadd.f32 %v265, %v266
        %v268 = vadd.f32 %v223, %v224
        %v269 = vrot.slane %v268, 4
        %v270 = vadd.f32 %v268, %v269
        %v271 = vrot.slane %v270, 2
        %v272 = vadd.f32 %v270, %v271
        %v273 = vrot.slane %v272, 1
        %v274 = vadd.f32 %v272, %v273
        %v275 = vadd.f32 %v225, %v226
        %v276 = vrot.slane %v275, 4
        %v277 = vadd.f32 %v275, %v276
        %v278 = vrot.slane %v277, 2
        %v279 = vadd.f32 %v277, %v278
        %v280 = vrot.slane %v279, 1
        %v281 = vadd.f32 %v279, %v280
        %v282 = vadd.f32 %v227, %v228
        %v283 = vrot.slane %v282, 4
        %v284 = vadd.f32 %v282, %v283
        %v285 = vrot.slane %v284, 2
        %v286 = vadd.f32 %v284, %v285
        %v287 = vrot.slane %v286, 1
        %v288 = vadd.f32 %v286, %v287
        %v289 = vadd.f32 %v229, %v230
        %v290 = vrot.slane %v289, 4
        %v291 = vadd.f32 %v289, %v290
        %v292 = vrot.slane %v291, 2
        %v293 = vadd.f32 %v291, %v292
        %v294 = vrot.slane %v293, 1
        %v295 = vadd.f32 %v293, %v294
        %v296 = vadd.f32 %v231, %v232
        %v297 = vrot.slane %v296, 4
        %v298 = vadd.f32 %v296, %v297
        %v299 = vrot.slane %v298, 2
        %v300 = vadd.f32 %v298, %v299
        %v301 = vrot.slane %v300, 1
        %v302 = vadd.f32 %v300, %v301
        %303 = vadd.xlane.f32.xlu0 %v204
        %v304 = vpop.xlane.xlu0 %303
        %305 = vadd.xlane.f32.xlu0 %v206
        %v306 = vpop.xlane.xlu0 %305
        %307 = vadd.xlane.f32.xlu0 %v208
        %v308 = vpop.xlane.xlu0 %307
        %309 = vadd.xlane.f32.xlu0 %v210
        %v310 = vpop.xlane.xlu0 %309
        %311 = vadd.xlane.f32.xlu0 %v212
        %v312 = vpop.xlane.xlu0 %311
        %313 = vadd.xlane.f32.xlu0 %v214
        %v314 = vpop.xlane.xlu0 %313
        %315 = vadd.xlane.f32.xlu0 %v216
        %v316 = vpop.xlane.xlu0 %315
        %317 = vadd.xlane.f32.xlu0 %v218
        %v318 = vpop.xlane.xlu0 %317
        %319 = vadd.xlane.f32.xlu0 %v220
        %v320 = vpop.xlane.xlu0 %319
        %321 = vadd.xlane.f32.xlu0 %v222
        %v322 = vpop.xlane.xlu0 %321
        %323 = vadd.xlane.f32.xlu0 %v223
        %v324 = vpop.xlane.xlu0 %323
        %325 = vadd.xlane.f32.xlu0 %v224
        %v326 = vpop.xlane.xlu0 %325
        %327 = vadd.xlane.f32.xlu0 %v225
        %v328 = vpop.xlane.xlu0 %327
        %329 = vadd.xlane.f32.xlu0 %v226
        %v330 = vpop.xlane.xlu0 %329
        %331 = vadd.xlane.f32.xlu0 %v227
        %v332 = vpop.xlane.xlu0 %331
        %333 = vadd.xlane.f32.xlu0 %v228
        %v334 = vpop.xlane.xlu0 %333
        %335 = vadd.xlane.f32.xlu0 %v229
        %v336 = vpop.xlane.xlu0 %335
        %337 = vadd.xlane.f32.xlu0 %v230
        %v338 = vpop.xlane.xlu0 %337
        %339 = vadd.xlane.f32.xlu0 %v231
        %v340 = vpop.xlane.xlu0 %339
        %341 = vadd.xlane.f32.xlu0 %v232
        %v342 = vpop.xlane.xlu0 %341
        %v343 = vmax.f32 %v239, 1e-30
        %v344 = vmax.f32 %v246, 1e-30
        %v345 = vmax.f32 %v253, 1e-30
        %v346 = vmax.f32 %v260, 1e-30
        %v347 = vmax.f32 %v267, 1e-30
        %v348 = vmax.f32 %v304, 1e-30
        %v349 = vmax.f32 %v306, 1e-30
        %v350 = vmax.f32 %v308, 1e-30
        %v351 = vmax.f32 %v310, 1e-30
        %v352 = vmax.f32 %v312, 1e-30
        %v353 = vmax.f32 %v314, 1e-30
        %v354 = vmax.f32 %v316, 1e-30
        %v355 = vmax.f32 %v318, 1e-30
        %v356 = vmax.f32 %v320, 1e-30
        %v357 = vmax.f32 %v322, 1e-30
        %v358 = vrcp.pop %v343
        %v359 = vmul.f32 %v274, %v358
        %v360 = vrcp.pop %v344
        %v361 = vmul.f32 %v281, %v360
        %v362 = vrcp.pop %v345
        %v363 = vmul.f32 %v288, %v362
        %v364 = vrcp.pop %v346
        %v365 = vmul.f32 %v295, %v364
        %v366 = vrcp.pop %v347
        %v367 = vmul.f32 %v302, %v366
        %v368 = vlog2.pop %v343
        %v369 = vmul.f32 %v368, 0.6931472
        %v370 = vlog2.pop %v344
        %v371 = vmul.f32 %v370, 0.6931472
        %v372 = vlog2.pop %v345
        %v373 = vmul.f32 %v372, 0.6931472
        %v374 = vlog2.pop %v346
        %v375 = vmul.f32 %v374, 0.6931472
        %v376 = vlog2.pop %v347
        %v377 = vmul.f32 %v376, 0.6931472
        %v378 = vsub.f32 %v359, %v369
        %v379 = vsub.f32 %v361, %v371
        %v380 = vsub.f32 %v363, %v373
        %v381 = vsub.f32 %v365, %v375
        %v382 = vsub.f32 %v367, %v377
        %v383 = vrcp.pop %v348
        %v384 = vmul.f32 %v324, %v383
        %v385 = vrcp.pop %v349
        %v386 = vmul.f32 %v326, %v385
        %v387 = vrcp.pop %v350
        %v388 = vmul.f32 %v328, %v387
        %v389 = vrcp.pop %v351
        %v390 = vmul.f32 %v330, %v389
        %v391 = vrcp.pop %v352
        %v392 = vmul.f32 %v332, %v391
        %v393 = vrcp.pop %v353
        %v394 = vmul.f32 %v334, %v393
        %v395 = vrcp.pop %v354
        %v396 = vmul.f32 %v336, %v395
        %v397 = vrcp.pop %v355
        %v398 = vmul.f32 %v338, %v397
        %v399 = vrcp.pop %v356
        %v400 = vmul.f32 %v340, %v399
        %v401 = vrcp.pop %v357
        %v402 = vmul.f32 %v342, %v401
        %v403 = vlog2.pop %v348
        %v404 = vmul.f32 %v403, 0.6931472
        %v405 = vlog2.pop %v349
        %v406 = vmul.f32 %v405, 0.6931472
        %v407 = vlog2.pop %v350
        %v408 = vmul.f32 %v407, 0.6931472
        %v409 = vlog2.pop %v351
        %v410 = vmul.f32 %v409, 0.6931472
        %v411 = vlog2.pop %v352
        %v412 = vmul.f32 %v411, 0.6931472
        %v413 = vlog2.pop %v353
        %v414 = vmul.f32 %v413, 0.6931472
        %v415 = vlog2.pop %v354
        %v416 = vmul.f32 %v415, 0.6931472
        %v417 = vlog2.pop %v355
        %v418 = vmul.f32 %v417, 0.6931472
        %v419 = vlog2.pop %v356
        %v420 = vmul.f32 %v419, 0.6931472
        %v421 = vlog2.pop %v357
        %v422 = vmul.f32 %v421, 0.6931472
        %v423 = vsub.f32 %v384, %v404
        %v424 = vsub.f32 %v386, %v406
        %v425 = vsub.f32 %v388, %v408
        %v426 = vsub.f32 %v390, %v410
        %v427 = vsub.f32 %v392, %v412
        %v428 = vsub.f32 %v394, %v414
        %v429 = vsub.f32 %v396, %v416
        %v430 = vsub.f32 %v398, %v418
        %v431 = vsub.f32 %v400, %v420
        %v432 = vsub.f32 %v402, %v422
        %433 = vadd.xlane.f32.xlu0 %v378
        %v434 = vpop.xlane.xlu0 %433
        %435 = vadd.xlane.f32.xlu0 %v379
        %v436 = vpop.xlane.xlu0 %435
        %437 = vadd.xlane.f32.xlu0 %v380
        %v438 = vpop.xlane.xlu0 %437
        %439 = vadd.xlane.f32.xlu0 %v381
        %v440 = vpop.xlane.xlu0 %439
        %441 = vadd.xlane.f32.xlu0 %v382
        %v442 = vpop.xlane.xlu0 %441
        %v443 = vadd.f32 %v423, %v424
        %v444 = vrot.slane %v443, 4
        %v445 = vadd.f32 %v443, %v444
        %v446 = vrot.slane %v445, 2
        %v447 = vadd.f32 %v445, %v446
        %v448 = vrot.slane %v447, 1
        %v449 = vadd.f32 %v447, %v448
        %v450 = vadd.f32 %v425, %v426
        %v451 = vrot.slane %v450, 4
        %v452 = vadd.f32 %v450, %v451
        %v453 = vrot.slane %v452, 2
        %v454 = vadd.f32 %v452, %v453
        %v455 = vrot.slane %v454, 1
        %v456 = vadd.f32 %v454, %v455
        %v457 = vadd.f32 %v427, %v428
        %v458 = vrot.slane %v457, 4
        %v459 = vadd.f32 %v457, %v458
        %v460 = vrot.slane %v459, 2
        %v461 = vadd.f32 %v459, %v460
        %v462 = vrot.slane %v461, 1
        %v463 = vadd.f32 %v461, %v462
        %v464 = vadd.f32 %v429, %v430
        %v465 = vrot.slane %v464, 4
        %v466 = vadd.f32 %v464, %v465
        %v467 = vrot.slane %v466, 2
        %v468 = vadd.f32 %v466, %v467
        %v469 = vrot.slane %v468, 1
        %v470 = vadd.f32 %v468, %v469
        %v471 = vadd.f32 %v431, %v432
        %v472 = vrot.slane %v471, 4
        %v473 = vadd.f32 %v471, %v472
        %v474 = vrot.slane %v473, 2
        %v475 = vadd.f32 %v473, %v474
        %v476 = vrot.slane %v475, 1
        %v477 = vadd.f32 %v475, %v476
        %v478 = vadd.f32 %v434, %v449
        %v479 = vadd.f32 %v436, %v456
        %v480 = vadd.f32 %v438, %v463
        %v481 = vadd.f32 %v440, %v470
        %v482 = vadd.f32 %v442, %v477
        %v483 = vlaneseq
        %v484 = vshrl.u32 %v483, 7
        %v485 = vstv %s137
        %v486 = vadd.s32 %v485, %v484
        %vm487 = vcmp.lt.s32.totalorder %v486, 10
        %vm493 = vcmask 1041409
        %v494 = vsel %vm493, %v479, %v478
        %vm495 = vcmask 1042434
        %v496 = vsel %vm495, %v480, %v494
        %vm497 = vcmask 1043459
        %v498 = vsel %vm497, %v481, %v496
        %vm499 = vcmask 1044484
        %v500 = vsel %vm499, %v482, %v498
        %v502 = vsel %vm487, %v500, 0.0
        %v503 = vadd.f32 %v502, 0.0
        %vm504 = vcmask 4096
        %v505 = vsel %vm504, %v503, 0.0
        %506 = vadd.xlane.f32.xlu0 %v505
        %v507 = vpop.xlane.xlu0 %506
        %v508 = vrot.slane %v507, 4
        %v509 = vadd.f32 %v507, %v508
        %v510 = vrot.slane %v509, 2
        %v511 = vadd.f32 %v509, %v510
        %v512 = vrot.slane %v511, 1
        %v513 = vadd.f32 %v511, %v512
        %s514 = vtos %v513
        %v515 = vstv %s514
        %516 = vst [vmem:[%s135] sm:$0xff] %v515
        %s517 = sand.u32 %s52, 1
        %s518 = scalar_lea.sflag [#allocation4], %s517
        %s519 = sand.u32 %s52, 1
        %s520 = smul.addr %s519, 8
        %s521 = scalar_lea.vmem [#allocation5], %s520
        // Predicated region
        $region29: #{tpu_custom_call.1} parent=23 // pred_check
          %p522 = pneg %p62
        $region30: #{tpu_custom_call.1} parent=23 // pred_check_branch
          %524 = sbr.rel (%p522) target = $region32
        $region31: #{tpu_custom_call.1} parent=23 // pred_region
          %s526 = ssub.s32 128, 128
          %527 = vsyncadd %s518, %s526
          %s528 = smul.addr %s18, 128
          %s529 = scalar_lea.hbm %s1, %s528
          %s531 = sshll.u32 %s521, 4
          %s532 = int_to_ptr.vmem [resolvable:$true] %s531
          %534 = dma.vmem_to_hbm [thread:$0]  %s532, 128, %s529, %s518
        $region32: #{tpu_custom_call.1} parent=23 // pred_fallthru
          _
      $region24: #{tpu_custom_call.1} parent=5 // pred_fallthru
        _
      %p535 = scmp.le.s32.totalorder 2, %s13
      // Predicated region
      $region33: #{tpu_custom_call.1} parent=5 // pred_check
        %p536 = pneg %p535
      $region34: #{tpu_custom_call.1} parent=5 // pred_check_branch
        %538 = sbr.rel (%p536) target = $region36
      $region35: #{tpu_custom_call.1} parent=5 // pred_region
        %s539 = ssub.s32 %s13, 2
        // Predicated region
        $region37: #{tpu_custom_call.1} parent=35 // pred_check
          %p540 = pneg %p68
        $region38: #{tpu_custom_call.1} parent=35 // pred_check_branch
          %542 = sbr.rel (%p540) target = $region40
        $region39: #{tpu_custom_call.1} parent=35 // pred_region
          %s543 = sand.u32 %s53, 1
          %s544 = scalar_lea.sflag [#allocation4], %s543
          %s545 = sand.u32 %s53, 1
          %s546 = smul.addr %s545, 8
          %s547 = scalar_lea.vmem [#allocation5], %s546
          %548 = dma.done %s544, 128
        $region40: #{tpu_custom_call.1} parent=35 // pred_fallthru
          _
      $region36: #{tpu_custom_call.1} parent=5 // pred_fallthru
        _
    $region6: #{tpu_custom_call.1} parent=1 // loop_footer
      %s17 = sadd.s32 1, %s13
    $region7: #{tpu_custom_call.1} parent=1 // loop_footer_branch
      %12 = sbr.rel target = $region3
    $region8: #{tpu_custom_call.1} parent=1 // loop_exit
      _
    %549 = vsyncpa [#allocation3], 1
    %s550 = scalar_lea.sflag [#allocation3], 1
    %551 = vsyncpa %s550, 1
    %552 = vsyncpa [#allocation4], 1
    %s553 = scalar_lea.sflag [#allocation4], 1
    %554 = vsyncpa %s553, 1

</llo_original>
